<compile_context>
chip_gen: v6e
topology: v6e:2x2x1
jax: 0.10.0
libtpu: 0.0.40
codegen_flags: <defaults>
</compile_context>

<pallas_src>
import jax
import jax.numpy as jnp
from jax.experimental import pallas as pl
from jax.experimental.pallas import tpu as pltpu

LANE = 128                 # TPU lane width (last-dim vreg axis)
MAX_TILE_ROWS = 4096       # 4096*128*4B = 2 MiB per buffer (f32)
SMALL_B_FAST_PATH = 1024   # below this, skip pallas_call entirely


def _round_up(n, m):
    return ((n + m - 1) // m) * m


def linear_kernel(wb_ref, x_ref, o_ref):
    # wb_ref is an SMEM scalar-prefetch ref: [weight, bias] (f32).
    w = wb_ref[0]
    b = wb_ref[1]
    # Pure VPU fused multiply-add on a lane-dense (tile_rows, 128) block.
    # Compute in f32, store in the caller's dtype (keeps HBM traffic narrow).
    x = x_ref[...].astype(jnp.float32)
    o_ref[...] = (x * w + b).astype(o_ref.dtype)


def linear_forward(x, weight, bias, *, force_pallas=False):
    """x: (B, 1), weight: (1, 1), bias: (1,) -> (B, 1) in x.dtype."""
    B = x.shape[0]
    out_dtype = x.dtype
    w_scalar = weight.reshape(())
    b_scalar = bias.reshape(())

    # Small-batch fast path: fixed pallas_call / pipeline overhead dominates,
    # the XLA-fused FMA is strictly faster there.
    if B < SMALL_B_FAST_PATH and not force_pallas:
        return (x * w_scalar + b_scalar).astype(out_dtype)

    # Lane-dense slab: (B, 1) -> (rows, LANE).  Free bitcast when B % 128 == 0;
    # otherwise pad only up to the next multiple of LANE.
    rows = pl.cdiv(B, LANE)
    flat = x.reshape(B)
    if rows * LANE != B:
        flat = jnp.pad(flat, (0, rows * LANE - B))
    x2d = flat.reshape(rows, LANE)

    # Sublane granularity for the storage dtype (f32 -> 8, bf16 -> 16, i8 -> 32).
    sub = 8 * (4 // jnp.dtype(out_dtype).itemsize)

    if rows <= sub:
        tile_rows = rows  # full-extent block (allowed: equals full array dim)
    else:
        # Aim for >= 2 grid steps (v7x megacore sharding) while keeping each
        # buffer <= ~2 MiB so double-buffered in+out fits every generation's
        # default scoped-VMEM budget.
        tile_rows = min(MAX_TILE_ROWS, _round_up(pl.cdiv(rows, 2), sub))

    grid = (pl.cdiv(rows, tile_rows),)  # ragged last block is masked by Pallas

    # Scalars (weight, bias) packed into one SMEM-prefetched array.
    wb = jnp.stack([w_scalar, b_scalar]).astype(jnp.float32)  # (2,)

    y2d = pl.pallas_call(
        linear_kernel,
        out_shape=jax.ShapeDtypeStruct((rows, LANE), out_dtype),
        grid_spec=pltpu.PrefetchScalarGridSpec(
            num_scalar_prefetch=1,
            grid=grid,
            in_specs=[
                pl.BlockSpec((tile_rows, LANE), lambda i, wb: (i, 0)),
            ],
            out_specs=pl.BlockSpec((tile_rows, LANE), lambda i, wb: (i, 0)),
        ),
        compiler_params=pltpu.CompilerParams(
            dimension_semantics=("parallel",),
        ),
    )(wb, x2d)

    # Back to the module's (B, 1) layout.  When B % LANE == 0 both the slice
    # and the reshape are no-ops (no HBM copy).
    return y2d.reshape(rows * LANE)[:B].reshape(B, 1)


if __name__ == "__main__":
    key = jax.random.PRNGKey(0)
    kw, kb, kx = jax.random.split(key, 3)

    # nn.Linear(1, 1)-style init: U(-1/sqrt(in), 1/sqrt(in)) with in = 1.
    weight = jax.random.uniform(kw, (1, 1), jnp.float32, -1.0, 1.0)
    bias = jax.random.uniform(kb, (1,), jnp.float32, -1.0, 1.0)

    # 1) The module's own tiny input (hour_var = [[4.0]]) plus one extra row:
    #    takes the small-batch fast path.
    x_small = jnp.array([[4.0], [5.0]], dtype=jnp.float32)
    y_small = jax.block_until_ready(linear_forward(x_small, weight, bias))
    ref_small = x_small @ weight.T + bias
    assert y_small.shape == ref_small.shape, (y_small.shape, ref_small.shape)
    assert jnp.allclose(y_small, ref_small, atol=1e-6), (y_small, ref_small)

    # 2) Same tiny batch forced through the Pallas kernel (pad/masked path).
    y_small_k = jax.block_until_ready(
        linear_forward(x_small, weight, bias, force_pallas=True))
    assert jnp.allclose(y_small_k, ref_small, atol=1e-6), (y_small_k, ref_small)

    # 3) A batch that takes the kernel path naturally: multiple of 128 so no
    #    pad / slice copies, and a multi-step grid.
    x_big = jax.random.normal(kx, (2048, 1), jnp.float32)
    y_big = jax.block_until_ready(linear_forward(x_big, weight, bias))
    ref_big = x_big @ weight.T + bias
    assert y_big.shape == ref_big.shape, (y_big.shape, ref_big.shape)
    assert jnp.allclose(y_big, ref_big, atol=1e-5), (y_big, ref_big)

    print("KERNEL_OK")
</pallas_src>

<mosaic_0001>
module attributes {stable_mosaic.version = 11 : i64} {
  func.func @linear_kernel(%arg0: i32, %arg1: memref<2xf32, #tpu.memory_space<smem>>, %arg2: memref<1x128xf32, #tpu.memory_space<vmem>>, %arg3: memref<1x128xf32, #tpu.memory_space<vmem>>) attributes {dimension_semantics = [#tpu.dimension_semantics<parallel>], iteration_bounds = array<i64: 1>, scalar_prefetch = 1 : i64, scratch_operands = 0 : i64, tpu.core_type = #tpu.core_type<tc>, window_params = [{transform_indices = @transform_0, window_bounds = array<i64: 1, 128>}, {transform_indices = @transform_1, window_bounds = array<i64: 1, 128>}]} {
    %c0 = arith.constant 0 : index
    %0 = memref.load %arg1[%c0] : memref<2xf32, #tpu.memory_space<smem>>
    %c1 = arith.constant 1 : index
    %1 = memref.load %arg1[%c1] : memref<2xf32, #tpu.memory_space<smem>>
    %c0_0 = arith.constant 0 : index
    %c0_1 = arith.constant 0 : index
    %2 = vector.load %arg2[%c0_0, %c0_1] : memref<1x128xf32, #tpu.memory_space<vmem>>, vector<1x128xf32>
    %3 = vector.broadcast %0 : f32 to vector<1x128xf32>
    %4 = arith.mulf %2, %3 : vector<1x128xf32>
    %5 = vector.broadcast %1 : f32 to vector<1x128xf32>
    %6 = arith.addf %4, %5 : vector<1x128xf32>
    %c0_2 = arith.constant 0 : index
    %c0_3 = arith.constant 0 : index
    %7 = vector.load %arg3[%c0_2, %c0_3] : memref<1x128xf32, #tpu.memory_space<vmem>>, vector<1x128xf32>
    tpu.vector_store %arg3[%c0_2, %c0_3], %6 {strides = array<i32>} : memref<1x128xf32, #tpu.memory_space<vmem>>, vector<1x128xf32>,
    return
  }
  func.func @transform_0(%arg0: i32, %arg1: memref<2xf32, #tpu.memory_space<smem>>) -> (i32, i32) {
    %c0_i32 = arith.constant 0 : i32
    %c0_i32_0 = arith.constant 0 : i32
    return %arg0, %c0_i32 : i32, i32
  }
  func.func @transform_1(%arg0: i32, %arg1: memref<2xf32, #tpu.memory_space<smem>>) -> (i32, i32) {
    %c0_i32 = arith.constant 0 : i32
    %c0_i32_0 = arith.constant 0 : i32
    return %arg0, %c0_i32 : i32, i32
  }
}

</mosaic_0001>

<llo_original>
// kernel: tpu_custom_call.1
$region0: #{tpu_custom_call.1}
  #allocation0 [shape = 'u32[]', space=smem, size = 0x4, offset = 0x4, fixed_abs, tag = 'smem constant byte address 0x4 - core index']
  #allocation1 [shape = 'u32[144,128]{1,0:T(1,128)}', space=vmem, size = 0x12000, scoped, tag = 'internal scratch']
  #allocation2 [shape = 's32[1]{0}', space=sflag, size = 0x4, scoped, tag = 'scoped memory for tpu_custom_call.1']
  #allocation3 [shape = 'u8[512]{0}', space=smem, size = 0x200, scoped, tag = 'prefetched SMEM operand 0']
  %s0 = inlined_call_operand.hbm [shape: f32[2], index: 0, kind: input, shape index: {}]
  %s1 = inlined_call_operand.vmem [shape: f32[1,128], index: 1, kind: input, shape index: {}]
  %s2 = inlined_call_operand.hbm [shape: f32[1,128], index: 2, kind: output, shape index: {}]
  %s3 = sld [smem:[#allocation0]]
  $region14: #{tpu_custom_call.1} parent=0
    _
  %s5 = ssub.s32 1, %s3
  %s6 = scalar_select 0, %s5, %s3
  %8 = dma.hbm_to_smem %s0, 16, [#allocation3], [#allocation2]
  %9 = dma.done [#allocation2], 16
  %10 = sfence
  $region1: #{tpu_custom_call.1} parent=0
    #allocation4 [shape = 'u8[512]{0}', space=vmem, size = 0x400, scoped, tag = 'output window, operand 0, single buffered']
    #allocation5 [shape = 's32[1]{0}', space=sflag, size = 0x4, scoped, tag = 'scoped memory for tpu_custom_call.1']
    %11 = vsyncpa [#allocation5], 0
    // Predicated region
    $region2: #{tpu_custom_call.1} parent=1 // pred_check
      _
    $region3: #{tpu_custom_call.1} parent=1 // pred_check_branch
      %13 = sbr.rel (0) target = $region5
    $region4: #{tpu_custom_call.1} parent=1 // pred_region
      _
    $region5: #{tpu_custom_call.1} parent=1 // pred_fallthru
      _
    %s14 = sld [smem:[#allocation3]]
    %s15 = sld [smem:[#allocation3 + $0x1]]
    %v16 = vld [vmem:[%s1] sm:$0x1]
    %v17 = vstv %s14
    %v18 = vmul.f32 %v16, %v17
    %v19 = vstv %s15
    %v20 = vadd.f32 %v18, %v19
    %21 = vst [vmem:[#allocation4] sm:$0x1] %v20
    // Predicated region
    $region6: #{tpu_custom_call.1} parent=1 // pred_check
      _
    $region7: #{tpu_custom_call.1} parent=1 // pred_check_branch
      %23 = sbr.rel (0) target = $region9
    $region8: #{tpu_custom_call.1} parent=1 // pred_region
      %s25 = ssub.s32 16, 16
      %26 = vsyncadd [#allocation5], %s25
      %s28 = sshll.u32 [#allocation4], 4
      %s29 = int_to_ptr.vmem [resolvable:$true] %s28
      %31 = dma.vmem_to_hbm [thread:$0]  %s29, 16, %s2, [#allocation5]
    $region9: #{tpu_custom_call.1} parent=1 // pred_fallthru
      _
    // Predicated region
    $region10: #{tpu_custom_call.1} parent=1 // pred_check
      _
    $region11: #{tpu_custom_call.1} parent=1 // pred_check_branch
      %33 = sbr.rel (0) target = $region13
    $region12: #{tpu_custom_call.1} parent=1 // pred_region
      %34 = dma.done [#allocation5], 16
    $region13: #{tpu_custom_call.1} parent=1 // pred_fallthru
      _
    %35 = vsyncpa [#allocation5], 1

</llo_original>
